<compile_context>
chip_gen: v7x
topology: tpu7x:2x2x1
jax: 0.10.0
libtpu: 0.0.40
codegen_flags: <defaults>
</compile_context>

<pallas_src>
import functools

import jax
import jax.numpy as jnp
from jax.experimental import pallas as pl
from jax.experimental.pallas import tpu as pltpu


# ------------------------- kernel bodies -----------------------------------


def _focal_terms(x, tgt, *, alpha, gamma):
    """Elementwise focal-loss terms.

    x   : (N, C, M) float32 logits block
    tgt : (N, 1, M) int32 class-id block
    """
    c_idx = jax.lax.broadcasted_iota(jnp.int32, x.shape, 1)          # class index
    is_pos = c_idx == jnp.broadcast_to(tgt, x.shape)                 # one-hot mask (never in HBM)
    pt = jax.nn.sigmoid(x)
    one_m_pt = 1.0 - pt
    log_pt = jnp.log(pt)
    log_1m_pt = jnp.log(one_m_pt)
    if gamma == 2:                                                   # static fast path (default)
        w_pos = one_m_pt * one_m_pt
        w_neg = pt * pt
    else:
        w_pos = jnp.power(one_m_pt, jnp.float32(gamma))
        w_neg = jnp.power(pt, jnp.float32(gamma))
    pos = (-alpha) * w_pos * log_pt                                  # target == class term
    neg = -(1.0 - alpha) * w_neg * log_1m_pt                         # target != class term
    return jnp.where(is_pos, pos, neg)


def _focal_reduce_kernel(pred_ref, tgt_ref, out_ref, acc_ref, *, alpha, gamma, scale):
    """Fused focal loss + running reduction.  out_ref: (1,1); acc_ref: (1, bm) VMEM."""
    i = pl.program_id(0)

    @pl.when(i == 0)
    def _init():
        acc_ref[...] = jnp.zeros_like(acc_ref)

    loss = _focal_terms(pred_ref[...], tgt_ref[...], alpha=alpha, gamma=gamma)

    # (N, C, bm) -> (1, bm): sublane-reduce each batch slice, add the (few) slices.
    part = jnp.sum(loss[0], axis=0, keepdims=True)
    for n in range(1, loss.shape[0]):
        part = part + jnp.sum(loss[n], axis=0, keepdims=True)
    acc_ref[...] += part

    @pl.when(i == pl.num_programs(0) - 1)
    def _finalize():
        out_ref[...] = jnp.sum(acc_ref[...], axis=1, keepdims=True) * scale


def _focal_elementwise_kernel(pred_ref, tgt_ref, out_ref, *, alpha, gamma):
    """reduction='none': write the lane-dense elementwise loss block."""
    out_ref[...] = _focal_terms(pred_ref[...], tgt_ref[...], alpha=alpha, gamma=gamma)


# ------------------------- wrapper ------------------------------------------


def _pick_block(m, block_m):
    if block_m is not None:
        assert m % block_m == 0 and (block_m % 128 == 0 or block_m == m), (m, block_m)
        return block_m
    if m % 128 != 0:
        return m                       # ragged spatial extent: one whole-axis block
    bm = 128
    while bm * 2 <= min(m, 2048) and m % (bm * 2) == 0:
        bm *= 2
    return bm


def bce_focal_loss(predict, target, gamma=2, alpha=0.25, reduction='mean',
                   block_m=None):
    """Fused Pallas TPU implementation of BCEFocalLoss.forward.

    predict: (N, C, H, W) float32 logits.
    target : (N, H, W) integer class labels in [0, C).
    """
    n, c, h, w = predict.shape
    m = h * w
    bm = _pick_block(m, block_m)
    grid = (m // bm,)
    alpha = float(alpha)

    pred2 = predict.reshape(n, c, m)                         # free contiguous view
    tgt2 = target.astype(jnp.int32).reshape(n, 1, m)         # free contiguous view

    pred_spec = pl.BlockSpec((n, c, bm), lambda i: (0, 0, i))
    tgt_spec = pl.BlockSpec((n, 1, bm), lambda i: (0, 0, i))

    if reduction == 'none':
        out = pl.pallas_call(
            functools.partial(_focal_elementwise_kernel, alpha=alpha, gamma=gamma),
            out_shape=jax.ShapeDtypeStruct((n, c, m), predict.dtype),
            grid=grid,
            in_specs=[pred_spec, tgt_spec],
            out_specs=pl.BlockSpec((n, c, bm), lambda i: (0, 0, i)),
            compiler_params=pltpu.CompilerParams(
                dimension_semantics=("parallel",)),
        )(pred2, tgt2)
        return out.reshape(n, c, h, w)

    if reduction == 'mean':
        scale = 1.0 / float(n * c * m)
    elif reduction == 'sum':
        scale = 1.0
    else:
        raise ValueError(f"unknown reduction: {reduction}")

    out = pl.pallas_call(
        functools.partial(_focal_reduce_kernel, alpha=alpha, gamma=gamma, scale=scale),
        out_shape=jax.ShapeDtypeStruct((1, 1), jnp.float32),
        grid=grid,
        in_specs=[pred_spec, tgt_spec],
        out_specs=pl.BlockSpec((1, 1), lambda i: (0, 0)),
        scratch_shapes=[pltpu.VMEM((1, bm), jnp.float32)],
        compiler_params=pltpu.CompilerParams(
            dimension_semantics=("arbitrary",)),       # running reduction over tiles
    )(pred2, tgt2)
    return out[0, 0]


# ------------------------- pure-JAX reference (PyTorch formula, literal) ----


def bce_focal_loss_reference(predict, target, gamma=2, alpha=0.25, reduction='mean'):
    pt = jax.nn.sigmoid(predict)
    nclass = predict.shape[1]
    t = jax.nn.one_hot(target, nclass, dtype=predict.dtype)   # (N, H, W, C)
    t = jnp.transpose(t, (0, 3, 1, 2))                        # (N, C, H, W)
    loss = (-alpha * (1.0 - pt) ** gamma * t * jnp.log(pt)
            - (1.0 - alpha) * pt ** gamma * (1.0 - t) * jnp.log(1.0 - pt))
    if reduction == 'mean':
        return jnp.mean(loss)
    if reduction == 'sum':
        return jnp.sum(loss)
    return loss


# ------------------------- main ---------------------------------------------

if __name__ == "__main__":
    key = jax.random.PRNGKey(0)
    N, C, H, W = 2, 4, 16, 16
    k_pred, k_tgt = jax.random.split(key)
    predict = jax.random.normal(k_pred, (N, C, H, W), jnp.float32) * 2.0
    target = jax.random.randint(k_tgt, (N, H, W), 0, C, dtype=jnp.int32)

    # block_m=128 -> grid=(2,) so the cross-tile accumulation path is exercised.
    fused = jax.jit(functools.partial(bce_focal_loss, gamma=2, alpha=0.25,
                                      reduction='mean', block_m=128))
    loss = jax.block_until_ready(fused(predict, target))
    ref = jax.block_until_ready(
        bce_focal_loss_reference(predict, target, 2, 0.25, 'mean'))
    assert loss.shape == ()
    assert jnp.allclose(loss, ref, rtol=1e-5, atol=1e-6), (loss, ref)

    # 'sum' and 'none' reductions through the same fused kernels.
    loss_sum = jax.block_until_ready(
        jax.jit(functools.partial(bce_focal_loss, reduction='sum'))(predict, target))
    ref_sum = bce_focal_loss_reference(predict, target, reduction='sum')
    assert jnp.allclose(loss_sum, ref_sum, rtol=1e-5, atol=1e-3), (loss_sum, ref_sum)

    loss_none = jax.block_until_ready(
        jax.jit(functools.partial(bce_focal_loss, reduction='none'))(predict, target))
    ref_none = bce_focal_loss_reference(predict, target, reduction='none')
    assert loss_none.shape == (N, C, H, W)
    assert jnp.allclose(loss_none, ref_none, rtol=1e-5, atol=1e-6)

    print("KERNEL_OK")
</pallas_src>

<mosaic_0001>
module attributes {stable_mosaic.version = 11 : i64} {
  func.func @_focal_reduce_kernel(%arg0: i32, %arg1: memref<2x4x128xf32, #tpu.memory_space<vmem>>, %arg2: memref<2x1x128xi32, #tpu.memory_space<vmem>>, %arg3: memref<1x1xf32, #tpu.memory_space<vmem>>, %arg4: memref<1x128xf32, #tpu.memory_space<vmem>>) attributes {dimension_semantics = [#tpu.dimension_semantics<arbitrary>], iteration_bounds = array<i64: 2>, scalar_prefetch = 0 : i64, scratch_operands = 1 : i64, tpu.core_type = #tpu.core_type<tc>, window_params = [{transform_indices = @transform_0, window_bounds = array<i64: 2, 4, 128>}, {transform_indices = @transform_1, window_bounds = array<i64: 2, 1, 128>}, {pipeline_mode = #tpu.pipeline_mode<synchronous>, transform_indices = @transform_2, window_bounds = array<i64: 1, 1>}]} {
    %c0_i32 = arith.constant 0 : i32
    %0 = arith.cmpi eq, %arg0, %c0_i32 : i32
    %1 = arith.extui %0 : i1 to i32
    %c0_i32_0 = arith.constant 0 : i32
    %2 = arith.cmpi ne, %1, %c0_i32_0 : i32
    scf.if %2 {
      %cst_16 = arith.constant 0.000000e+00 : f32
      %42 = vector.broadcast %cst_16 : f32 to vector<1x128xf32>
      %c0_17 = arith.constant 0 : index
      %c0_18 = arith.constant 0 : index
      %43 = vector.load %arg4[%c0_17, %c0_18] : memref<1x128xf32, #tpu.memory_space<vmem>>, vector<1x128xf32>
      tpu.vector_store %arg4[%c0_17, %c0_18], %42 {strides = array<i32>} : memref<1x128xf32, #tpu.memory_space<vmem>>, vector<1x128xf32>,
    } else {
    }
    %c0 = arith.constant 0 : index
    %c0_1 = arith.constant 0 : index
    %c0_2 = arith.constant 0 : index
    %3 = vector.load %arg1[%c0, %c0_1, %c0_2] : memref<2x4x128xf32, #tpu.memory_space<vmem>>, vector<2x4x128xf32>
    %c0_3 = arith.constant 0 : index
    %c0_4 = arith.constant 0 : index
    %c0_5 = arith.constant 0 : index
    %4 = vector.load %arg2[%c0_3, %c0_4, %c0_5] : memref<2x1x128xi32, #tpu.memory_space<vmem>>, vector<2x1x128xi32>
    %5 = tpu.iota {dimensions = array<i32: 1>} : vector<2x4x128xi32>
    %6 = vector.shape_cast %4 : vector<2x1x128xi32> to vector<2x1x128xi32>
    %7 = vector.broadcast %6 : vector<2x1x128xi32> to vector<2x4x128xi32>
    %8 = arith.cmpi eq, %5, %7 : vector<2x4x128xi32>
    %9 = arith.negf %3 : vector<2x4x128xf32>
    %10 = math.exp %9 : vector<2x4x128xf32>
    %cst = arith.constant 1.000000e+00 : f32
    %11 = vector.broadcast %cst : f32 to vector<2x4x128xf32>
    %12 = arith.addf %11, %10 : vector<2x4x128xf32>
    %13 = arith.divf %11, %12 : vector<2x4x128xf32>
    %cst_6 = arith.constant 1.000000e+00 : f32
    %14 = vector.broadcast %cst_6 : f32 to vector<2x4x128xf32>
    %15 = arith.subf %14, %13 : vector<2x4x128xf32>
    %16 = math.log %13 : vector<2x4x128xf32>
    %17 = math.log %15 : vector<2x4x128xf32>
    %18 = arith.mulf %15, %15 : vector<2x4x128xf32>
    %19 = arith.mulf %13, %13 : vector<2x4x128xf32>
    %cst_7 = arith.constant -2.500000e-01 : f32
    %20 = vector.broadcast %cst_7 : f32 to vector<2x4x128xf32>
    %21 = arith.mulf %20, %18 : vector<2x4x128xf32>
    %22 = arith.mulf %21, %16 : vector<2x4x128xf32>
    %cst_8 = arith.constant -7.500000e-01 : f32
    %23 = vector.broadcast %cst_8 : f32 to vector<2x4x128xf32>
    %24 = arith.mulf %23, %19 : vector<2x4x128xf32>
    %25 = arith.mulf %24, %17 : vector<2x4x128xf32>
    %26 = arith.select %8, %22, %25 : vector<2x4x128xi1>, vector<2x4x128xf32>
    %27 = vector.extract_strided_slice %26 {offsets = [0, 0, 0], sizes = [1, 4, 128], strides = [1, 1, 1]} : vector<2x4x128xf32> to vector<1x4x128xf32>
    %28 = vector.shape_cast %27 : vector<1x4x128xf32> to vector<4x128xf32>
    %cst_9 = arith.constant dense<0.000000e+00> : vector<128xf32>
    %29 = vector.multi_reduction <add>, %28, %cst_9 [0] : vector<4x128xf32> to vector<128xf32>
    %30 = vector.shape_cast %29 : vector<128xf32> to vector<1x128xf32>
    %31 = vector.extract_strided_slice %26 {offsets = [1, 0, 0], sizes = [1, 4, 128], strides = [1, 1, 1]} : vector<2x4x128xf32> to vector<1x4x128xf32>
    %32 = vector.shape_cast %31 : vector<1x4x128xf32> to vector<4x128xf32>
    %cst_10 = arith.constant dense<0.000000e+00> : vector<128xf32>
    %33 = vector.multi_reduction <add>, %32, %cst_10 [0] : vector<4x128xf32> to vector<128xf32>
    %34 = vector.shape_cast %33 : vector<128xf32> to vector<1x128xf32>
    %35 = arith.addf %30, %34 : vector<1x128xf32>
    %c0_11 = arith.constant 0 : index
    %c0_12 = arith.constant 0 : index
    %36 = vector.load %arg4[%c0_11, %c0_12] : memref<1x128xf32, #tpu.memory_space<vmem>>, vector<1x128xf32>
    %37 = arith.addf %36, %35 : vector<1x128xf32>
    %c0_13 = arith.constant 0 : index
    %c0_14 = arith.constant 0 : index
    %38 = vector.load %arg4[%c0_13, %c0_14] : memref<1x128xf32, #tpu.memory_space<vmem>>, vector<1x128xf32>
    tpu.vector_store %arg4[%c0_13, %c0_14], %37 {strides = array<i32>} : memref<1x128xf32, #tpu.memory_space<vmem>>, vector<1x128xf32>,
    %c1_i32 = arith.constant 1 : i32
    %39 = arith.cmpi eq, %arg0, %c1_i32 : i32
    %40 = arith.extui %39 : i1 to i32
    %c0_i32_15 = arith.constant 0 : i32
    %41 = arith.cmpi ne, %40, %c0_i32_15 : i32
    scf.if %41 {
      %c0_16 = arith.constant 0 : index
      %c0_17 = arith.constant 0 : index
      %42 = vector.load %arg4[%c0_16, %c0_17] : memref<1x128xf32, #tpu.memory_space<vmem>>, vector<1x128xf32>
      %cst_18 = arith.constant dense<0.000000e+00> : vector<1xf32>
      %43 = vector.multi_reduction <add>, %42, %cst_18 [1] : vector<1x128xf32> to vector<1xf32>
      %44 = vector.shape_cast %43 : vector<1xf32> to vector<1x1xf32>
      %cst_19 = arith.constant 4.8828125E-4 : f32
      %45 = vector.broadcast %cst_19 : f32 to vector<1x1xf32>
      %46 = arith.mulf %44, %45 : vector<1x1xf32>
      %c0_20 = arith.constant 0 : index
      %c0_21 = arith.constant 0 : index
      %47 = vector.load %arg3[%c0_20, %c0_21] : memref<1x1xf32, #tpu.memory_space<vmem>>, vector<1x1xf32>
      tpu.vector_store %arg3[%c0_20, %c0_21], %46 {strides = array<i32>} : memref<1x1xf32, #tpu.memory_space<vmem>>, vector<1x1xf32>,
    } else {
    }
    return
  }
  func.func @transform_0(%arg0: i32) -> (i32, i32, i32) {
    %c0_i32 = arith.constant 0 : i32
    %c0_i32_0 = arith.constant 0 : i32
    %c0_i32_1 = arith.constant 0 : i32
    return %c0_i32, %c0_i32_0, %arg0 : i32, i32, i32
  }
  func.func @transform_1(%arg0: i32) -> (i32, i32, i32) {
    %c0_i32 = arith.constant 0 : i32
    %c0_i32_0 = arith.constant 0 : i32
    %c0_i32_1 = arith.constant 0 : i32
    return %c0_i32, %c0_i32_0, %arg0 : i32, i32, i32
  }
  func.func @transform_2(%arg0: i32) -> (i32, i32) {
    %c0_i32 = arith.constant 0 : i32
    %c0_i32_0 = arith.constant 0 : i32
    %c0_i32_1 = arith.constant 0 : i32
    return %c0_i32, %c0_i32_0 : i32, i32
  }
}

</mosaic_0001>

<llo_original>
// kernel: bce_focal_loss.1
$region0: #{bce_focal_loss.1}
  #allocation0 [shape = 'u32[]', space=smem, size = 0x4, offset = 0x4, fixed_abs, tag = 'smem constant byte address 0x4 - core index']
  #allocation1 [shape = 'u32[144,128]{1,0:T(1,128)}', space=vmem, size = 0x12000, scoped, tag = 'internal scratch']
  #allocation2 [shape = 'f32[1,128]{1,0:T(1,128)}', space=vmem, size = 0x200, scoped, tag = 'scratch operand']
  %s0 = inlined_call_operand.vmem [shape: f32[2,4,256], index: 0, kind: input, shape index: {}]
  %s1 = inlined_call_operand.vmem [shape: s32[2,1,256], index: 1, kind: input, shape index: {}]
  %s2 = inlined_call_operand.hbm [shape: f32[1,1], index: 2, kind: output, shape index: {}]
  %s3 = sld [smem:[#allocation0]]
  $region124: #{bce_focal_loss.1} parent=0
    _
  %s5 = ssub.s32 1, %s3
  %s6 = scalar_select 0, %s5, %s3
  $region1: #{bce_focal_loss.1} parent=0
    #allocation3 [shape = 'u8[8192]{0}', space=vmem, size = 0x2000, scoped, tag = 'input window, operand 0']
    #allocation4 [shape = 'u8[2048]{0}', space=vmem, size = 0x800, scoped, tag = 'input window, operand 1']
    #allocation5 [shape = 'u8[512]{0}', space=vmem, size = 0x400, scoped, tag = 'output window, operand 0, single buffered']
    #allocation6 [shape = 's32[2]{0}', space=sflag, size = 0x8, scoped, tag = 'scoped memory for bce_focal_loss.1']
    %7 = vsyncpa [#allocation6], 0
    loop: start=0, step=1, limit=4
    $region2: #{bce_focal_loss.1} parent=1 // loop_pre_header
      _
    $region3: #{bce_focal_loss.1} parent=1 // loop_header
      %s9 = sphi 0, %s13
      %p10 = scmp.ge.s32.totalorder %s9, 4
      %s19 = sphi 0, %s21
      %s22 = sphi 0, %s19
      %s23 = sphi 0, %s22
      %s39 = sphi 0, %s23
      %s45 = sphi 0, %s47
      %s48 = sphi 0, %s45
      %s49 = sphi 0, %s48
      %s65 = sphi 0, %s49
      %s69 = sphi 0, %s69
      %s71 = sphi 0, %s69
      %s72 = sphi 0, %s71
      %s86 = sphi 0, %s72
    $region4: #{bce_focal_loss.1} parent=1 // loop_header_branch
      %12 = sbr.rel (%p10) target = $region8
    $region5: #{bce_focal_loss.1} parent=1 // loop_body
      %s14 = ssub.s32 %s9, 1
      %s15 = ssub.s32 %s9, 2
      %s16 = sadd.s32 %s9, 1
      %s17 = ssub.s32 %s9, %s16
      %p18 = scmp.eq.s32.totalorder %s17, 0
      %s20 = sadd.s32 %s19, 1
      %s21 = scalar_select %p18, %s19, %s20
      %p24 = pneg %p18
      %p25 = scmp.eq.s32.totalorder %s9, 1
      %p26 = por %p24, %p25
      %p27 = scmp.ne.s32.totalorder %s19, %s22
      %p28 = scmp.eq.s32.totalorder %s9, 0
      %p29 = por %p27, %p28
      %p30 = scmp.ne.s32.totalorder %s19, %s22
      %p31 = scmp.eq.s32.totalorder %s14, 1
      %p32 = por %p30, %p31
      %p33 = scmp.ne.s32.totalorder %s22, %s23
      %p34 = scmp.eq.s32.totalorder %s14, 0
      %p35 = por %p33, %p34
      %p36 = scmp.ne.s32.totalorder %s22, %s23
      %p37 = scmp.eq.s32.totalorder %s15, 1
      %p38 = por %p36, %p37
      %p40 = scmp.ne.s32.totalorder %s23, %s39
      %p41 = scmp.eq.s32.totalorder %s15, 0
      %p42 = por %p40, %p41
      %s43 = ssub.s32 %s9, %s16
      %p44 = scmp.eq.s32.totalorder %s43, 0
      %s46 = sadd.s32 %s45, 1
      %s47 = scalar_select %p44, %s45, %s46
      %p50 = pneg %p44
      %p51 = scmp.eq.s32.totalorder %s9, 1
      %p52 = por %p50, %p51
      %p53 = scmp.ne.s32.totalorder %s45, %s48
      %p54 = scmp.eq.s32.totalorder %s9, 0
      %p55 = por %p53, %p54
      %p56 = scmp.ne.s32.totalorder %s45, %s48
      %p57 = scmp.eq.s32.totalorder %s14, 1
      %p58 = por %p56, %p57
      %p59 = scmp.ne.s32.totalorder %s48, %s49
      %p60 = scmp.eq.s32.totalorder %s14, 0
      %p61 = por %p59, %p60
      %p62 = scmp.ne.s32.totalorder %s48, %s49
      %p63 = scmp.eq.s32.totalorder %s15, 1
      %p64 = por %p62, %p63
      %p66 = scmp.ne.s32.totalorder %s49, %s65
      %p67 = scmp.eq.s32.totalorder %s15, 0
      %p68 = por %p66, %p67
      %s70 = sadd.s32 %s69, 1
      %p73 = scmp.eq.s32.totalorder %s9, 1
      %p74 = scmp.ne.s32.totalorder %s69, %s71
      %p75 = scmp.eq.s32.totalorder %s9, 0
      %p76 = por %p74, %p75
      %p77 = scmp.ne.s32.totalorder %s69, %s71
      %p78 = scmp.eq.s32.totalorder %s14, 1
      %p79 = por %p77, %p78
      %p80 = scmp.ne.s32.totalorder %s71, %s72
      %p81 = scmp.eq.s32.totalorder %s14, 0
      %p82 = por %p80, %p81
      %p83 = scmp.ne.s32.totalorder %s71, %s72
      %p84 = scmp.eq.s32.totalorder %s15, 1
      %p85 = por %p83, %p84
      %p87 = scmp.ne.s32.totalorder %s72, %s86
      %p88 = scmp.eq.s32.totalorder %s15, 0
      %p89 = por %p87, %p88
      %p90 = scmp.le.s32.totalorder 1, %s9
      %p91 = scmp.lt.s32.totalorder %s9, 3
      %p92 = pnand %p90, %p91
      %p93 = pneg %p92
      // Predicated region
      $region9: #{bce_focal_loss.1} parent=5 // pred_check
        _
      $region10: #{bce_focal_loss.1} parent=5 // pred_check_branch
        %95 = sbr.rel (%p92) target = $region12
      $region11: #{bce_focal_loss.1} parent=5 // pred_region
        %s96 = ssub.s32 %s9, 1
      $region12: #{bce_focal_loss.1} parent=5 // pred_fallthru
        _
      %p97 = scmp.lt.s32.totalorder %s9, 2
      // Predicated region
      $region13: #{bce_focal_loss.1} parent=5 // pred_check
        %p98 = pneg %p97
      $region14: #{bce_focal_loss.1} parent=5 // pred_check_branch
        %100 = sbr.rel (%p98) target = $region16
      $region15: #{bce_focal_loss.1} parent=5 // pred_region
        // Predicated region
        $region17: #{bce_focal_loss.1} parent=15 // pred_check
          %p101 = pneg %p29
        $region18: #{bce_focal_loss.1} parent=15 // pred_check_branch
          %103 = sbr.rel (%p101) target = $region20
        $region19: #{bce_focal_loss.1} parent=15 // pred_region
          %s104 = sand.u32 %s19, 1
          %s105 = sand.u32 %s19, 1
          %s106 = smul.addr %s105, 8
          %s107 = scalar_lea.vmem [#allocation3], %s106
          %s108 = smul.addr %s9, 4
          %s109 = scalar_lea.vmem %s0, %s108
          // Predicated region
          $region21: #{bce_focal_loss.1} parent=19 // pred_check
            _
          $region22: #{bce_focal_loss.1} parent=19 // pred_check_branch
            %111 = sbr.rel (0) target = $region24
          $region23: #{bce_focal_loss.1} parent=19 // pred_region
            // Predicated region
            $region25: #{bce_focal_loss.1} parent=23 // pred_check
              _
            $region26: #{bce_focal_loss.1} parent=23 // pred_check_branch
              %113 = sbr.rel target = $region28
            $region27: #{bce_focal_loss.1} parent=23 // pred_region
              // Predicated region
              $region40: #{bce_focal_loss.1} parent=27 // pred_check
                _
              $region41: #{bce_focal_loss.1} parent=27 // pred_check_branch
                %130 = sbr.rel (0) target = $region43
              $region42: #{bce_focal_loss.1} parent=27 // pred_region
                loop: start=0, step=1, limit=1
                $region44: #{bce_focal_loss.1} parent=42 // loop_pre_header
                  _
                $region45: #{bce_focal_loss.1} parent=42 // loop_header
                  %s132 = sphi 0, %s136
                  %p133 = scmp.ge.s32.totalorder %s132, 1
                  %s137 = sphi %s109, %s109
                  %s138 = sphi %s107, %s107
                $region46: #{bce_focal_loss.1} parent=42 // loop_header_branch
                  %135 = sbr.rel (%p133) target = $region50
                $region47: #{bce_focal_loss.1} parent=42 // loop_body
                  _
                $region48: #{bce_focal_loss.1} parent=42 // loop_footer
                  %s136 = sadd.s32 1, %s132
                $region49: #{bce_focal_loss.1} parent=42 // loop_footer_branch
                  %131 = sbr.rel target = $region45
                $region50: #{bce_focal_loss.1} parent=42 // loop_exit
                  _
                loop: start=0, step=1, limit=1
                $region51: #{bce_focal_loss.1} parent=42 // loop_pre_header
                  _
                $region52: #{bce_focal_loss.1} parent=42 // loop_header
                  %s141 = sphi 0, %s145
                  %p142 = scmp.ge.s32.totalorder %s141, 1
                  %s146 = sphi %s109, %s109
                  %s147 = sphi %s107, %s107
                $region53: #{bce_focal_loss.1} parent=42 // loop_header_branch
                  %144 = sbr.rel (%p142) target = $region57
                $region54: #{bce_focal_loss.1} parent=42 // loop_body
                  %v148 = vld [vmem:[%s146] sm:$0xf]
                  %149 = vst [vmem:[%s147] sm:$0xf] %v148
                  %v150 = vld [vmem:[%s146 + $0x8] sm:$0xf]
                  %151 = vst [vmem:[%s147 + $0x4] sm:$0xf] %v150
                $region55: #{bce_focal_loss.1} parent=42 // loop_footer
                  %s145 = sadd.s32 1, %s141
                $region56: #{bce_focal_loss.1} parent=42 // loop_footer_branch
                  %140 = sbr.rel target = $region52
                $region57: #{bce_focal_loss.1} parent=42 // loop_exit
                  _
              $region43: #{bce_focal_loss.1} parent=27 // pred_fallthru
                _
            $region28: #{bce_focal_loss.1} parent=23 // pred_fallthru
              _
            // Predicated region
            $region29: #{bce_focal_loss.1} parent=23 // pred_check
              _
            $region30: #{bce_focal_loss.1} parent=23 // pred_check_branch
              %115 = sbr.rel (0) target = $region32
            $region31: #{bce_focal_loss.1} parent=23 // pred_region
              loop: start=0, step=1, limit=1
              $region33: #{bce_focal_loss.1} parent=31 // loop_pre_header
                _
              $region34: #{bce_focal_loss.1} parent=31 // loop_header
                %s118 = sphi 0, %s122
                %p119 = scmp.ge.s32.totalorder %s118, 1
                %s123 = sphi %s109, %s109
                %s124 = sphi %s107, %s107
              $region35: #{bce_focal_loss.1} parent=31 // loop_header_branch
                %121 = sbr.rel (%p119) target = $region39
              $region36: #{bce_focal_loss.1} parent=31 // loop_body
                %v125 = vld [vmem:[%s123] sm:$0xf]
                %126 = vst [vmem:[%s124] sm:$0xf] %v125
                %v127 = vld [vmem:[%s123 + $0x8] sm:$0xf]
                %128 = vst [vmem:[%s124 + $0x4] sm:$0xf] %v127
              $region37: #{bce_focal_loss.1} parent=31 // loop_footer
                %s122 = sadd.s32 1, %s118
              $region38: #{bce_focal_loss.1} parent=31 // loop_footer_branch
                %117 = sbr.rel target = $region34
              $region39: #{bce_focal_loss.1} parent=31 // loop_exit
                _
            $region32: #{bce_focal_loss.1} parent=23 // pred_fallthru
              _
          $region24: #{bce_focal_loss.1} parent=19 // pred_fallthru
            _
          %152 = vnop
        $region20: #{bce_focal_loss.1} parent=15 // pred_fallthru
          _
        // Predicated region
        $region58: #{bce_focal_loss.1} parent=15 // pred_check
          %p153 = pneg %p55
        $region59: #{bce_focal_loss.1} parent=15 // pred_check_branch
          %155 = sbr.rel (%p153) target = $region61
        $region60: #{bce_focal_loss.1} parent=15 // pred_region
          %s156 = sand.u32 %s45, 1
          %s157 = sand.u32 %s45, 1
          %s158 = smul.addr %s157, 2
          %s159 = scalar_lea.vmem [#allocation4], %s158
          %s160 = scalar_lea.vmem %s1, %s9
          // Predicated region
          $region62: #{bce_focal_loss.1} parent=60 // pred_check
            _
          $region63: #{bce_focal_loss.1} parent=60 // pred_check_branch
            %162 = sbr.rel (0) target = $region65
          $region64: #{bce_focal_loss.1} parent=60 // pred_region
            // Predicated region
            $region66: #{bce_focal_loss.1} parent=64 // pred_check
              _
            $region67: #{bce_focal_loss.1} parent=64 // pred_check_branch
              %164 = sbr.rel target = $region69
            $region68: #{bce_focal_loss.1} parent=64 // pred_region
              // Predicated region
              $region81: #{bce_focal_loss.1} parent=68 // pred_check
                _
              $region82: #{bce_focal_loss.1} parent=68 // pred_check_branch
                %181 = sbr.rel (0) target = $region84
              $region83: #{bce_focal_loss.1} parent=68 // pred_region
                loop: start=0, step=1, limit=1
                $region85: #{bce_focal_loss.1} parent=83 // loop_pre_header
                  _
                $region86: #{bce_focal_loss.1} parent=83 // loop_header
                  %s184 = sphi 0, %s188
                  %p185 = scmp.ge.s32.totalorder %s184, 1
                  %s189 = sphi %s160, %s160
                  %s190 = sphi %s159, %s159
                $region87: #{bce_focal_loss.1} parent=83 // loop_header_branch
                  %187 = sbr.rel (%p185) target = $region91
                $region88: #{bce_focal_loss.1} parent=83 // loop_body
                  %v191 = vld [vmem:[%s189] sm:$0x1]
                  %192 = vst [vmem:[%s190] sm:$0x1] %v191
                  %v193 = vld [vmem:[%s189 + $0x2] sm:$0x1]
                  %194 = vst [vmem:[%s190 + $0x1] sm:$0x1] %v193
                $region89: #{bce_focal_loss.1} parent=83 // loop_footer
                  %s188 = sadd.s32 1, %s184
                $region90: #{bce_focal_loss.1} parent=83 // loop_footer_branch
                  %183 = sbr.rel target = $region86
                $region91: #{bce_focal_loss.1} parent=83 // loop_exit
                  _
              $region84: #{bce_focal_loss.1} parent=68 // pred_fallthru
                _
            $region69: #{bce_focal_loss.1} parent=64 // pred_fallthru
              _
            // Predicated region
            $region70: #{bce_focal_loss.1} parent=64 // pred_check
              _
            $region71: #{bce_focal_loss.1} parent=64 // pred_check_branch
              %166 = sbr.rel (0) target = $region73
            $region72: #{bce_focal_loss.1} parent=64 // pred_region
              loop: start=0, step=1, limit=1
              $region74: #{bce_focal_loss.1} parent=72 // loop_pre_header
                _
              $region75: #{bce_focal_loss.1} parent=72 // loop_header
                %s169 = sphi 0, %s173
                %p170 = scmp.ge.s32.totalorder %s169, 1
                %s174 = sphi %s160, %s160
                %s175 = sphi %s159, %s159
              $region76: #{bce_focal_loss.1} parent=72 // loop_header_branch
                %172 = sbr.rel (%p170) target = $region80
              $region77: #{bce_focal_loss.1} parent=72 // loop_body
                %v176 = vld [vmem:[%s174] sm:$0x1]
                %177 = vst [vmem:[%s175] sm:$0x1] %v176
                %v178 = vld [vmem:[%s174 + $0x2] sm:$0x1]
                %179 = vst [vmem:[%s175 + $0x1] sm:$0x1] %v178
              $region78: #{bce_focal_loss.1} parent=72 // loop_footer
                %s173 = sadd.s32 1, %s169
              $region79: #{bce_focal_loss.1} parent=72 // loop_footer_branch
                %168 = sbr.rel target = $region75
              $region80: #{bce_focal_loss.1} parent=72 // loop_exit
                _
            $region73: #{bce_focal_loss.1} parent=64 // pred_fallthru
              _
          $region65: #{bce_focal_loss.1} parent=60 // pred_fallthru
            _
          %195 = vnop
        $region61: #{bce_focal_loss.1} parent=15 // pred_fallthru
          _
      $region16: #{bce_focal_loss.1} parent=5 // pred_fallthru
        _
      %p196 = scmp.le.s32.totalorder 1, %s9
      %p197 = scmp.lt.s32.totalorder %s9, 3
      %p198 = pnand %p196, %p197
      %p199 = pneg %p198
      // Predicated region
      $region92: #{bce_focal_loss.1} parent=5 // pred_check
        _
      $region93: #{bce_focal_loss.1} parent=5 // pred_check_branch
        %201 = sbr.rel (%p198) target = $region95
      $region94: #{bce_focal_loss.1} parent=5 // pred_region
        %s202 = ssub.s32 %s9, 1
        %s203 = sand.u32 %s22, 1
        %s204 = sand.u32 %s22, 1
        %s205 = smul.addr %s204, 8
        %s206 = scalar_lea.vmem [#allocation3], %s205
        // Predicated region
        $region96: #{bce_focal_loss.1} parent=94 // pred_check
          %p207 = pneg %p35
        $region97: #{bce_focal_loss.1} parent=94 // pred_check_branch
          %209 = sbr.rel (%p207) target = $region99
        $region98: #{bce_focal_loss.1} parent=94 // pred_region
          _
        $region99: #{bce_focal_loss.1} parent=94 // pred_fallthru
          _
        %s210 = sand.u32 %s48, 1
        %s211 = sand.u32 %s48, 1
        %s212 = smul.addr %s211, 2
        %s213 = scalar_lea.vmem [#allocation4], %s212
        // Predicated region
        $region100: #{bce_focal_loss.1} parent=94 // pred_check
          %p214 = pneg %p61
        $region101: #{bce_focal_loss.1} parent=94 // pred_check_branch
          %216 = sbr.rel (%p214) target = $region103
        $region102: #{bce_focal_loss.1} parent=94 // pred_region
          _
        $region103: #{bce_focal_loss.1} parent=94 // pred_fallthru
          _
        %s217 = sand.u32 %s22, 1
        %s218 = sand.u32 %s22, 1
        %s219 = smul.addr %s218, 8
        %s220 = scalar_lea.vmem [#allocation3], %s219
        %p221 = pneg %p35
        %p222 = pneg %p32
        %s223 = sand.u32 %s48, 1
        %s224 = sand.u32 %s48, 1
        %s225 = smul.addr %s224, 2
        %s226 = scalar_lea.vmem [#allocation4], %s225
        %p227 = pneg %p61
        %p228 = pneg %p58
        %p229 = pneg %p82
        %p230 = pneg %p79
        %p231 = scmp.eq.s32.totalorder %s14, 0
        // Predicated region
        $region104: #{bce_focal_loss.1} parent=94 // pred_check
          %p232 = pneg %p231
        $region105: #{bce_focal_loss.1} parent=94 // pred_check_branch
          %234 = sbr.rel (%p232) target = $region107
        $region106: #{bce_focal_loss.1} parent=94 // pred_region
          %235 = vst [vmem:[#allocation2] sm:$0x1] 0.0
        $region107: #{bce_focal_loss.1} parent=94 // pred_fallthru
          _
        %v236 = vld [vmem:[%s206] sm:$0xf]
        %v237 = vld [vmem:[%s206 + $0x4] sm:$0xf]
        %v238 = vld [vmem:[%s213] sm:$0x1]
        %v239 = vld [vmem:[%s213 + $0x1] sm:$0x1]
        %v240 = vlaneseq
        %v241 = vshrl.u32 %v240, 7
        %v242 = vlaneseq
        %v243 = vshrl.u32 %v242, 7
        %v244 = vsub.s32 0, %v243
        %v245 = vrot.slane %v238, %v244
        %v246 = vlaneseq
        %v247 = vshrl.u32 %v246, 7
        %v248 = vsub.s32 0, %v247
        %v249 = vrot.slane %v239, %v248
        %vm250 = vcmp.eq.s32.totalorder %v241, %v245
        %vm251 = vcmp.eq.s32.totalorder %v241, %v249
        %v252 = vxor.u32 %v236, 2147483648
        %v253 = vxor.u32 %v237, 2147483648
        %v254 = vmul.f32 %v252, 1.442695
        %v255 = vpow.pop %v254
        %v256 = vmul.f32 %v253, 1.442695
        %v257 = vpow.pop %v256
        %v258 = vadd.f32 %v255, 1.0
        %v259 = vadd.f32 %v257, 1.0
        %v260 = vrcp.pop %v258
        %v261 = vmul.f32 1.0, %v260
        %v262 = vrcp.pop %v259
        %v263 = vmul.f32 1.0, %v262
        %v264 = vsub.f32 1.0, %v261
        %v265 = vsub.f32 1.0, %v263
        %v266 = vlog2.pop %v261
        %v267 = vmul.f32 %v266, 0.6931472
        %v268 = vlog2.pop %v263
        %v269 = vmul.f32 %v268, 0.6931472
        %v270 = vlog2.pop %v264
        %v271 = vmul.f32 %v270, 0.6931472
        %v272 = vlog2.pop %v265
        %v273 = vmul.f32 %v272, 0.6931472
        %v274 = vmul.f32 %v264, %v264
        %v275 = vmul.f32 %v265, %v265
        %v276 = vmul.f32 %v261, %v261
        %v277 = vmul.f32 %v263, %v263
        %v278 = vmul.f32 %v274, -0.25
        %v279 = vmul.f32 %v275, -0.25
        %v280 = vmul.f32 %v278, %v267
        %v281 = vmul.f32 %v279, %v269
        %v282 = vmul.f32 %v276, -0.75
        %v283 = vmul.f32 %v277, -0.75
        %v284 = vmul.f32 %v282, %v271
        %v285 = vmul.f32 %v283, %v273
        %v286 = vsel %vm250, %v280, %v284
        %v287 = vsel %vm251, %v281, %v285
        %vm288 = vcmask 1043456
        %v289 = vsel %vm288, %v286, 0.0
        %v290 = vrot.slane %v289, 4
        %v291 = vadd.f32 %v289, %v290
        %v292 = vrot.slane %v291, 2
        %v293 = vadd.f32 %v291, %v292
        %v294 = vrot.slane %v293, 1
        %v295 = vadd.f32 %v293, %v294
        %v296 = vsel %vm288, %v287, 0.0
        %v297 = vrot.slane %v296, 4
        %v298 = vadd.f32 %v296, %v297
        %v299 = vrot.slane %v298, 2
        %v300 = vadd.f32 %v298, %v299
        %v301 = vrot.slane %v300, 1
        %v302 = vadd.f32 %v300, %v301
        %v303 = vadd.f32 %v295, %v302
        %v304 = vld [vmem:[#allocation2] sm:$0x1]
        %v305 = vadd.f32 %v304, %v303
        %306 = vst [vmem:[#allocation2] sm:$0x1] %v305
        %p307 = scmp.eq.s32.totalorder %s14, 1
        // Predicated region
        $region108: #{bce_focal_loss.1} parent=94 // pred_check
          %p308 = pneg %p307
        $region109: #{bce_focal_loss.1} parent=94 // pred_check_branch
          %310 = sbr.rel (%p308) target = $region111
        $region110: #{bce_focal_loss.1} parent=94 // pred_region
          %v311 = vld [vmem:[#allocation2] sm:$0x1]
          %vm312 = vcmask 1040384
          %v313 = vsel %vm312, %v311, 0.0
          %314 = vadd.xlane.f32.xlu0 %v313
          %v315 = vpop.xlane.xlu0 %314
          %v316 = vmul.f32 %v315, 0.00048828125
          %vm317 = vcmask 0
          %318 = vst.msk [vmem:[#allocation5] sm:$0x1] %vm317, %v316
        $region111: #{bce_focal_loss.1} parent=94 // pred_fallthru
          _
        // Predicated region
        $region112: #{bce_focal_loss.1} parent=94 // pred_check
          %p319 = pneg %p79
        $region113: #{bce_focal_loss.1} parent=94 // pred_check_branch
          %321 = sbr.rel (%p319) target = $region115
        $region114: #{bce_focal_loss.1} parent=94 // pred_region
          %s323 = ssub.s32 16, 16
          %324 = vsyncadd [#allocation6], %s323
          %s326 = sshll.u32 [#allocation5], 4
          %s327 = int_to_ptr.vmem [resolvable:$true] %s326
          %329 = dma.vmem_to_hbm [thread:$0]  %s327, 16, %s2, [#allocation6]
        $region115: #{bce_focal_loss.1} parent=94 // pred_fallthru
          _
        // Predicated region
        $region116: #{bce_focal_loss.1} parent=94 // pred_check
          %p330 = pneg %p79
        $region117: #{bce_focal_loss.1} parent=94 // pred_check_branch
          %332 = sbr.rel (%p330) target = $region119
        $region118: #{bce_focal_loss.1} parent=94 // pred_region
          %333 = dma.done [#allocation6], 16
        $region119: #{bce_focal_loss.1} parent=94 // pred_fallthru
          _
      $region95: #{bce_focal_loss.1} parent=5 // pred_fallthru
        _
      %p334 = scmp.le.s32.totalorder 2, %s9
      // Predicated region
      $region120: #{bce_focal_loss.1} parent=5 // pred_check
        %p335 = pneg %p334
      $region121: #{bce_focal_loss.1} parent=5 // pred_check_branch
        %337 = sbr.rel (%p335) target = $region123
      $region122: #{bce_focal_loss.1} parent=5 // pred_region
        %s338 = ssub.s32 %s9, 2
      $region123: #{bce_focal_loss.1} parent=5 // pred_fallthru
        _
    $region6: #{bce_focal_loss.1} parent=1 // loop_footer
      %s13 = sadd.s32 1, %s9
    $region7: #{bce_focal_loss.1} parent=1 // loop_footer_branch
      %8 = sbr.rel target = $region3
    $region8: #{bce_focal_loss.1} parent=1 // loop_exit
      _
    %339 = vsyncpa [#allocation6], 1
    %s340 = scalar_lea.sflag [#allocation6], 1
    %341 = vsyncpa %s340, 1

</llo_original>
